<compile_context>
chip_gen: v7x
topology: tpu7x:2x2x1
jax: 0.10.0
libtpu: 0.0.40
codegen_flags: <defaults>
</compile_context>

<pallas_src>
import jax
import jax.numpy as jnp
from jax.experimental import pallas as pl
from jax.experimental.pallas import tpu as pltpu


_LANE = 512                           # lane-dense last dim (multiple of 128)
_MAX_BLOCK_BYTES = 2 * 1024 * 1024    # per-block cap; 2 bufs x (in+out) = 8 MiB
_VMEM_LIMIT_BYTES = 32 * 1024 * 1024  # safe headroom on v5e/v6e/v7x
_MIN_KERNEL_ELEMS = 4096              # below this, kernel overhead dominates


def _round_up(x: int, m: int) -> int:
    return ((x + m - 1) // m) * m


def _copy_kernel(x_ref, o_ref):
    # Straight VMEM tile copy: out[tile] = in[tile].
    o_ref[...] = x_ref[...]


def _pick_tile_rows(rows: int, cols: int, itemsize: int) -> int:
    """Row-tile: multiple of 32, <= ~2 MiB/block, >= 4 blocks when possible."""
    if rows <= 32:
        return rows  # single block; equal-to-full-dim is always legal
    budget = max(32, (_MAX_BLOCK_BYTES // (cols * itemsize)) // 32 * 32)
    # Aim for >= 4 grid blocks (>= 2 per TensorCore on v7x) so the BlockSpec
    # pipeline has prefetch(i+1)/writeback(i-1) overlap.
    quarter = max(32, _round_up(pl.cdiv(rows, 4), 32))
    return min(budget, quarter)


@jax.jit
def _pallas_identity_copy(x: jax.Array) -> jax.Array:
    """Bit-exact copy of `x` through a tiled, lane-dense Pallas TPU kernel."""
    orig_shape = x.shape
    dtype = x.dtype
    n = x.size
    if n == 0 or n < _MIN_KERNEL_ELEMS:
        # Fixed pallas_call + per-step overhead dominates tiny copies.
        return x
    itemsize = jnp.dtype(dtype).itemsize

    # Pick a 2-D view of x.  Both branches are reshapes of a contiguous
    # row-major array => view-level under XLA, no extra HBM pass.
    if n % _LANE == 0:
        rows, cols = n // _LANE, _LANE          # lane-dense: unmasked vst
    elif x.ndim >= 2:
        cols = orig_shape[-1]
        rows = n // cols                        # natural (batch*seq, last_dim)
    else:
        rows, cols = 1, n                       # 1-D ragged: one full block

    tile_rows = _pick_tile_rows(rows, cols, itemsize)
    if tile_rows * cols * itemsize > 2 * _MAX_BLOCK_BYTES:
        # TODO(synk): add a column grid for pathological ragged last dims.
        return x

    x2d = x.reshape(rows, cols)
    grid = (pl.cdiv(rows, tile_rows),)          # final partial block is masked

    out2d = pl.pallas_call(
        _copy_kernel,
        out_shape=jax.ShapeDtypeStruct((rows, cols), dtype),
        grid_spec=pltpu.PrefetchScalarGridSpec(
            num_scalar_prefetch=0,
            grid=grid,
            in_specs=[pl.BlockSpec((tile_rows, cols), lambda i: (i, 0))],
            out_specs=pl.BlockSpec((tile_rows, cols), lambda i: (i, 0)),
        ),
        cost_estimate=pl.CostEstimate(
            flops=0, transcendentals=0, bytes_accessed=2 * n * itemsize),
        compiler_params=pltpu.CompilerParams(
            dimension_semantics=("parallel",),
            vmem_limit_bytes=_VMEM_LIMIT_BYTES,
        ),
    )(x2d)

    return out2d.reshape(orig_shape)


def empty_module_forward(x: jax.Array, lens: jax.Array, *,
                         use_pallas_copy: bool = False) -> jax.Array:
    """Identity forward pass of EmptyModule.

    x:    (batch, seq, input_dim) array (any dtype)
    lens: (batch,) lengths — unused (matches the PyTorch module)

    Hot path returns `x` unchanged (no kernel, no HBM traffic).  Set
    `use_pallas_copy=True` to route the tensor through the Pallas copy kernel
    (plumbing/debug only; never flip this on outside tests).
    """
    del lens  # unused, exactly like the reference module
    if not use_pallas_copy:
        return x
    return _pallas_identity_copy(x)


def get_output_dim(input_dim: int) -> int:
    # Mirrors EmptyModule.get_output_dim()
    return input_dim


if __name__ == "__main__":
    key = jax.random.PRNGKey(0)
    k1, k2, k3 = jax.random.split(key, 3)

    # 1) Production hot path: small shape, pure identity, no kernel launched.
    batch, seq, input_dim = 2, 8, 32
    x_small = jax.random.normal(k1, (batch, seq, input_dim), dtype=jnp.float32)
    lens = jnp.array([8, 5], dtype=jnp.int32)  # ignored by the module
    y_fast = jax.block_until_ready(empty_module_forward(x_small, lens))

    # 2) Debug/plumbing path, lane-dense branch (size % 512 == 0):
    #    32768 f32 elems -> view (64, 512), tile_rows=32, grid=(2,).
    x_big = jax.random.normal(k2, (8, 128, 32), dtype=jnp.float32)
    lens_big = jnp.full((8,), 128, dtype=jnp.int32)
    y_big = jax.block_until_ready(
        empty_module_forward(x_big, lens_big, use_pallas_copy=True))

    # 3) Debug/plumbing path, ragged branch (size % 512 != 0):
    #    (3, 37, 100) bf16 -> view (111, 100), tile_rows=32, grid=(4,),
    #    final partial block handled by Pallas masking (no jnp.pad).
    x_rag = jax.random.normal(k3, (3, 37, 100), dtype=jnp.bfloat16)
    lens_rag = jnp.array([37, 20, 5], dtype=jnp.int32)
    y_rag = jax.block_until_ready(
        empty_module_forward(x_rag, lens_rag, use_pallas_copy=True))

    assert y_fast.shape == x_small.shape and y_fast.dtype == x_small.dtype
    assert y_big.shape == x_big.shape and y_big.dtype == x_big.dtype
    assert y_rag.shape == x_rag.shape and y_rag.dtype == x_rag.dtype
    assert bool(jnp.array_equal(y_fast, x_small))
    assert bool(jnp.array_equal(y_big, x_big))
    assert bool(jnp.array_equal(y_rag, x_rag))
    assert get_output_dim(input_dim) == input_dim

    print("KERNEL_OK")
</pallas_src>

<mosaic_0001>
module attributes {stable_mosaic.version = 11 : i64} {
  func.func @_copy_kernel(%arg0: i32, %arg1: memref<32x512xf32, #tpu.memory_space<vmem>>, %arg2: memref<32x512xf32, #tpu.memory_space<vmem>>) attributes {dimension_semantics = [#tpu.dimension_semantics<parallel>], iteration_bounds = array<i64: 2>, scalar_prefetch = 0 : i64, scratch_operands = 0 : i64, tpu.core_type = #tpu.core_type<tc>, window_params = [{transform_indices = @transform_0, window_bounds = array<i64: 32, 512>}, {transform_indices = @transform_1, window_bounds = array<i64: 32, 512>}]} {
    %c0 = arith.constant 0 : index
    %c0_0 = arith.constant 0 : index
    %0 = vector.load %arg1[%c0, %c0_0] : memref<32x512xf32, #tpu.memory_space<vmem>>, vector<32x512xf32>
    %c0_1 = arith.constant 0 : index
    %c0_2 = arith.constant 0 : index
    %1 = vector.load %arg2[%c0_1, %c0_2] : memref<32x512xf32, #tpu.memory_space<vmem>>, vector<32x512xf32>
    tpu.vector_store %arg2[%c0_1, %c0_2], %0 {strides = array<i32>} : memref<32x512xf32, #tpu.memory_space<vmem>>, vector<32x512xf32>,
    return
  }
  func.func @transform_0(%arg0: i32) -> (i32, i32) {
    %c0_i32 = arith.constant 0 : i32
    %c0_i32_0 = arith.constant 0 : i32
    return %arg0, %c0_i32 : i32, i32
  }
  func.func @transform_1(%arg0: i32) -> (i32, i32) {
    %c0_i32 = arith.constant 0 : i32
    %c0_i32_0 = arith.constant 0 : i32
    return %arg0, %c0_i32 : i32, i32
  }
}

</mosaic_0001>

<llo_original>
// kernel: _pallas_identity_copy.1
$region0: #{_pallas_identity_copy.1}
  #allocation0 [shape = 'u32[]', space=smem, size = 0x4, offset = 0x4, fixed_abs, tag = 'smem constant byte address 0x4 - core index']
  #allocation1 [shape = 'u32[144,128]{1,0:T(1,128)}', space=vmem, size = 0x12000, scoped, tag = 'internal scratch']
  %s0 = inlined_call_operand.vmem [shape: f32[64,512], index: 0, kind: input, shape index: {}]
  %s1 = inlined_call_operand.vmem [shape: f32[64,512], index: 1, kind: output, shape index: {}]
  %s2 = sld [smem:[#allocation0]]
  $region37: #{_pallas_identity_copy.1} parent=0
    _
  %s4 = ssub.s32 1, %s2
  %s5 = scalar_select 0, %s4, %s2
  loop: start=0, step=1, limit=4
  $region2: #{_pallas_identity_copy.1} parent=0 // loop_pre_header
    _
  $region3: #{_pallas_identity_copy.1} parent=0 // loop_header
    %s7 = sphi 0, %s11
    %p8 = scmp.ge.s32.totalorder %s7, 4
    %s17 = sphi 0, %s19
    %s20 = sphi 0, %s17
    %s21 = sphi 0, %s20
    %s37 = sphi 0, %s21
    %s43 = sphi 0, %s45
    %s46 = sphi 0, %s43
    %s47 = sphi 0, %s46
    %s63 = sphi 0, %s47
  $region4: #{_pallas_identity_copy.1} parent=0 // loop_header_branch
    %10 = sbr.rel (%p8) target = $region8
  $region5: #{_pallas_identity_copy.1} parent=0 // loop_body
    %s12 = ssub.s32 %s7, 1
    %s13 = ssub.s32 %s7, 2
    %s14 = sadd.s32 %s7, 1
    %s15 = ssub.s32 %s7, %s14
    %p16 = scmp.eq.s32.totalorder %s15, 0
    %s18 = sadd.s32 %s17, 1
    %s19 = scalar_select %p16, %s17, %s18
    %p22 = pneg %p16
    %p23 = scmp.eq.s32.totalorder %s7, 1
    %p24 = por %p22, %p23
    %p25 = scmp.ne.s32.totalorder %s17, %s20
    %p26 = scmp.eq.s32.totalorder %s7, 0
    %p27 = por %p25, %p26
    %p28 = scmp.ne.s32.totalorder %s17, %s20
    %p29 = scmp.eq.s32.totalorder %s12, 1
    %p30 = por %p28, %p29
    %p31 = scmp.ne.s32.totalorder %s20, %s21
    %p32 = scmp.eq.s32.totalorder %s12, 0
    %p33 = por %p31, %p32
    %p34 = scmp.ne.s32.totalorder %s20, %s21
    %p35 = scmp.eq.s32.totalorder %s13, 1
    %p36 = por %p34, %p35
    %p38 = scmp.ne.s32.totalorder %s21, %s37
    %p39 = scmp.eq.s32.totalorder %s13, 0
    %p40 = por %p38, %p39
    %s41 = ssub.s32 %s7, %s14
    %p42 = scmp.eq.s32.totalorder %s41, 0
    %s44 = sadd.s32 %s43, 1
    %s45 = scalar_select %p42, %s43, %s44
    %p48 = pneg %p42
    %p49 = scmp.eq.s32.totalorder %s7, 1
    %p50 = por %p48, %p49
    %p51 = scmp.ne.s32.totalorder %s43, %s46
    %p52 = scmp.eq.s32.totalorder %s7, 0
    %p53 = por %p51, %p52
    %p54 = scmp.ne.s32.totalorder %s43, %s46
    %p55 = scmp.eq.s32.totalorder %s12, 1
    %p56 = por %p54, %p55
    %p57 = scmp.ne.s32.totalorder %s46, %s47
    %p58 = scmp.eq.s32.totalorder %s12, 0
    %p59 = por %p57, %p58
    %p60 = scmp.ne.s32.totalorder %s46, %s47
    %p61 = scmp.eq.s32.totalorder %s13, 1
    %p62 = por %p60, %p61
    %p64 = scmp.ne.s32.totalorder %s47, %s63
    %p65 = scmp.eq.s32.totalorder %s13, 0
    %p66 = por %p64, %p65
    %p67 = scmp.le.s32.totalorder 1, %s7
    %p68 = scmp.lt.s32.totalorder %s7, 3
    %p69 = pnand %p67, %p68
    %p70 = pneg %p69
    // Predicated region
    $region9: #{_pallas_identity_copy.1} parent=5 // pred_check
      _
    $region10: #{_pallas_identity_copy.1} parent=5 // pred_check_branch
      %72 = sbr.rel (%p69) target = $region12
    $region11: #{_pallas_identity_copy.1} parent=5 // pred_region
      %s73 = ssub.s32 %s7, 1
    $region12: #{_pallas_identity_copy.1} parent=5 // pred_fallthru
      _
    %p74 = scmp.lt.s32.totalorder %s7, 2
    // Predicated region
    $region13: #{_pallas_identity_copy.1} parent=5 // pred_check
      %p75 = pneg %p74
    $region14: #{_pallas_identity_copy.1} parent=5 // pred_check_branch
      %77 = sbr.rel (%p75) target = $region16
    $region15: #{_pallas_identity_copy.1} parent=5 // pred_region
      // Predicated region
      $region17: #{_pallas_identity_copy.1} parent=15 // pred_check
        %p78 = pneg %p27
      $region18: #{_pallas_identity_copy.1} parent=15 // pred_check_branch
        %80 = sbr.rel (%p78) target = $region20
      $region19: #{_pallas_identity_copy.1} parent=15 // pred_region
        %s81 = smul.u32 4, %s7
        %p82 = scmp.lt.s32.totalorder %s81, 7
        %s83 = scalar_select %p82, %s81, 7
        %s84 = smul.addr %s83, 4
        %s85 = smul.addr %s84, 8
        %s86 = scalar_lea.vmem %s0, %s85
        %s87 = smul.u32 4, %s7
      $region20: #{_pallas_identity_copy.1} parent=15 // pred_fallthru
        _
    $region16: #{_pallas_identity_copy.1} parent=5 // pred_fallthru
      _
    %p88 = scmp.le.s32.totalorder 1, %s7
    %p89 = scmp.lt.s32.totalorder %s7, 3
    %p90 = pnand %p88, %p89
    %p91 = pneg %p90
    // Predicated region
    $region21: #{_pallas_identity_copy.1} parent=5 // pred_check
      _
    $region22: #{_pallas_identity_copy.1} parent=5 // pred_check_branch
      %93 = sbr.rel (%p90) target = $region24
    $region23: #{_pallas_identity_copy.1} parent=5 // pred_region
      %s94 = ssub.s32 %s7, 1
      %s95 = smul.u32 4, %s12
      %p96 = scmp.lt.s32.totalorder %s95, 7
      %s97 = scalar_select %p96, %s95, 7
      %s98 = smul.addr %s97, 4
      %s99 = smul.addr %s98, 8
      %s100 = scalar_lea.vmem %s0, %s99
      %p101 = pneg %p33
      %p102 = pneg %p30
      %p103 = pneg %p59
      %p104 = pneg %p56
      %s105 = smul.u32 4, %s12
      %p106 = scmp.lt.s32.totalorder %s105, 7
      %s107 = scalar_select %p106, %s105, 7
      %s108 = smul.addr %s107, 4
      %s109 = smul.addr %s108, 8
      %s110 = scalar_lea.vmem %s1, %s109
      %s111 = smul.u32 4, %s12
      %p112 = scmp.lt.s32.totalorder %s111, 7
      %s113 = scalar_select %p112, %s111, 7
      %s114 = smul.addr %s113, 4
      %s115 = smul.addr %s114, 8
      %s116 = scalar_lea.vmem %s0, %s115
      %s117 = smul.u32 4, %s12
      %s118 = smul.u32 4, %s12
      %p119 = scmp.lt.s32.totalorder %s118, 7
      %s120 = scalar_select %p119, %s118, 7
      %s121 = smul.addr %s120, 4
      %s122 = smul.addr %s121, 8
      %s123 = scalar_lea.vmem %s1, %s122
      %s124 = smul.u32 4, %s12
      %v125 = vld [vmem:[%s116] sm:$0xff]
      %v126 = vld [vmem:[%s116 + $0x8] sm:$0xff]
      %v127 = vld [vmem:[%s116 + $0x10] sm:$0xff]
      %v128 = vld [vmem:[%s116 + $0x18] sm:$0xff]
      %v129 = vld [vmem:[%s116 + $0x20] sm:$0xff]
      %v130 = vld [vmem:[%s116 + $0x28] sm:$0xff]
      %v131 = vld [vmem:[%s116 + $0x30] sm:$0xff]
      %v132 = vld [vmem:[%s116 + $0x38] sm:$0xff]
      %v133 = vld [vmem:[%s116 + $0x40] sm:$0xff]
      %v134 = vld [vmem:[%s116 + $0x48] sm:$0xff]
      %v135 = vld [vmem:[%s116 + $0x50] sm:$0xff]
      %v136 = vld [vmem:[%s116 + $0x58] sm:$0xff]
      %v137 = vld [vmem:[%s116 + $0x60] sm:$0xff]
      %v138 = vld [vmem:[%s116 + $0x68] sm:$0xff]
      %v139 = vld [vmem:[%s116 + $0x70] sm:$0xff]
      %v140 = vld [vmem:[%s116 + $0x78] sm:$0xff]
      %141 = vst [vmem:[%s123] sm:$0xff] %v125
      %142 = vst [vmem:[%s123 + $0x8] sm:$0xff] %v126
      %143 = vst [vmem:[%s123 + $0x10] sm:$0xff] %v127
      %144 = vst [vmem:[%s123 + $0x18] sm:$0xff] %v128
      %145 = vst [vmem:[%s123 + $0x20] sm:$0xff] %v129
      %146 = vst [vmem:[%s123 + $0x28] sm:$0xff] %v130
      %147 = vst [vmem:[%s123 + $0x30] sm:$0xff] %v131
      %148 = vst [vmem:[%s123 + $0x38] sm:$0xff] %v132
      %149 = vst [vmem:[%s123 + $0x40] sm:$0xff] %v133
      %150 = vst [vmem:[%s123 + $0x48] sm:$0xff] %v134
      %151 = vst [vmem:[%s123 + $0x50] sm:$0xff] %v135
      %152 = vst [vmem:[%s123 + $0x58] sm:$0xff] %v136
      %153 = vst [vmem:[%s123 + $0x60] sm:$0xff] %v137
      %154 = vst [vmem:[%s123 + $0x68] sm:$0xff] %v138
      %155 = vst [vmem:[%s123 + $0x70] sm:$0xff] %v139
      %156 = vst [vmem:[%s123 + $0x78] sm:$0xff] %v140
      %s157 = smul.u32 4, %s12
      %p158 = scmp.lt.s32.totalorder %s157, 7
      %s159 = scalar_select %p158, %s157, 7
      %s160 = smul.addr %s159, 4
      %s161 = smul.addr %s160, 8
      %s162 = scalar_lea.vmem %s1, %s161
      // Predicated region
      $region25: #{_pallas_identity_copy.1} parent=23 // pred_check
        %p163 = pneg %p56
      $region26: #{_pallas_identity_copy.1} parent=23 // pred_check_branch
        %165 = sbr.rel (%p163) target = $region28
      $region27: #{_pallas_identity_copy.1} parent=23 // pred_region
        %s166 = smul.u32 4, %s12
      $region28: #{_pallas_identity_copy.1} parent=23 // pred_fallthru
        _
    $region24: #{_pallas_identity_copy.1} parent=5 // pred_fallthru
      _
    %p167 = scmp.le.s32.totalorder 2, %s7
    // Predicated region
    $region29: #{_pallas_identity_copy.1} parent=5 // pred_check
      %p168 = pneg %p167
    $region30: #{_pallas_identity_copy.1} parent=5 // pred_check_branch
      %170 = sbr.rel (%p168) target = $region32
    $region31: #{_pallas_identity_copy.1} parent=5 // pred_region
      %s171 = ssub.s32 %s7, 2
      // Predicated region
      $region33: #{_pallas_identity_copy.1} parent=31 // pred_check
        %p172 = pneg %p62
      $region34: #{_pallas_identity_copy.1} parent=31 // pred_check_branch
        %174 = sbr.rel (%p172) target = $region36
      $region35: #{_pallas_identity_copy.1} parent=31 // pred_region
        %s175 = smul.u32 4, %s13
        %p176 = scmp.lt.s32.totalorder %s175, 7
        %s177 = scalar_select %p176, %s175, 7
        %s178 = smul.addr %s177, 4
        %s179 = smul.addr %s178, 8
        %s180 = scalar_lea.vmem %s1, %s179
      $region36: #{_pallas_identity_copy.1} parent=31 // pred_fallthru
        _
    $region32: #{_pallas_identity_copy.1} parent=5 // pred_fallthru
      _
  $region6: #{_pallas_identity_copy.1} parent=0 // loop_footer
    %s11 = sadd.s32 1, %s7
  $region7: #{_pallas_identity_copy.1} parent=0 // loop_footer_branch
    %6 = sbr.rel target = $region3
  $region8: #{_pallas_identity_copy.1} parent=0 // loop_exit
    _

</llo_original>
